<compile_context>
chip_gen: v7x
topology: tpu7x:2x2x1
jax: 0.10.0
libtpu: 0.0.40
codegen_flags: <defaults>
</compile_context>

<pallas_src>
import functools

import jax
import jax.numpy as jnp
import numpy as np
from jax.experimental import pallas as pl
from jax.experimental.pallas import tpu as pltpu

NEG_SLOPE = 0.2   # GATConv default negative_slope (python float literal)
NEG_INF = -1e30   # finite masked-logit value (avoids inf-inf NaNs in online softmax)


# -----------------------------------------------------------------------------
# Stage 1: fused projection kernel.  One MXU matmul per node tile produces the
# per-head features AND the per-node attention scalars (att vectors folded into
# the weight matrix in the wrapper).
# -----------------------------------------------------------------------------
def gat_proj_kernel(x_ref, w_aug_ref, h_ref, a_ref, *, hf):
    h_aug = jnp.dot(x_ref[...], w_aug_ref[...],
                    preferred_element_type=jnp.float32)       # [T, HF + 2H] f32
    h_ref[...] = h_aug[:, :hf].astype(h_ref.dtype)            # bf16 features for aggregation
    a_ref[...] = h_aug[:, hf:]                                 # [T, 2H] f32 (a_src | a_dst)


# -----------------------------------------------------------------------------
# Stage 2: masked attention + aggregation with online softmax.
# grid = (dst tiles ["parallel"], src tiles ["arbitrary", last]).
# -----------------------------------------------------------------------------
def gat_attn_kernel(h_ref, asrc_ref, adst_ref, adj_ref, bias_ref, out_ref,
                    m_sc, l_sc, acc_sc, *, num_heads, fout):
    j = pl.program_id(1)

    @pl.when(j == 0)
    def _init():
        m_sc[...] = jnp.full_like(m_sc, NEG_INF)
        l_sc[...] = jnp.zeros_like(l_sc)
        acc_sc[...] = jnp.zeros_like(acc_sc)

    # int8 adjacency tile -> boolean edge mask; hoisted out of the head loop.
    edge = adj_ref[...].astype(jnp.float32) > 0.0              # [T, S]

    h = h_ref[...]                                             # [S, HF] bf16 (source tile)
    a_dst = adst_ref[...]                                      # [T, H]  f32
    a_src = asrc_ref[...]                                      # [H, S]  f32

    for head in range(num_heads):                              # H is small -> unrolled
        e = a_dst[:, head:head + 1] + a_src[head:head + 1, :]  # [T, S]
        e = jnp.where(e > 0.0, e, NEG_SLOPE * e)               # leaky_relu(0.2)
        e = jnp.where(edge, e, NEG_INF)                        # mask folded into select

        m_prev = m_sc[head]                                    # [T, 1]
        m_new = jnp.maximum(m_prev, jnp.max(e, axis=1, keepdims=True))
        scale = jnp.exp(m_prev - m_new)                        # [T, 1]
        p = jnp.exp(e - m_new)                                 # [T, S] f32

        l_sc[head] = scale * l_sc[head] + jnp.sum(p, axis=1, keepdims=True)
        acc_sc[head] = scale * acc_sc[head] + jnp.dot(
            p.astype(jnp.bfloat16),                            # bf16 MXU operands,
            h[:, head * fout:(head + 1) * fout],               # f32 accumulation
            preferred_element_type=jnp.float32)
        m_sc[head] = m_new

    @pl.when(j == pl.num_programs(1) - 1)
    def _finalize():
        outs = [acc_sc[hd] * pl.reciprocal(l_sc[hd], approx=True)   # EUP reciprocal
                for hd in range(num_heads)]
        # single lane-dense store (HF = H*F = 128 lanes): concat heads + bias once.
        out_ref[...] = jnp.concatenate(outs, axis=1) + bias_ref[...]


def _augment_weights(w, att_src, att_dst):
    """W_aug = [W | W_h @ att_src_h (per head) | W_h @ att_dst_h (per head)]."""
    num_heads, fout = att_src.shape
    fin = w.shape[0]
    w_heads = w.reshape(fin, num_heads, fout)
    w_src_cols = jnp.einsum("fhk,hk->fh", w_heads, att_src)    # [Fin, H]
    w_dst_cols = jnp.einsum("fhk,hk->fh", w_heads, att_dst)    # [Fin, H]
    return jnp.concatenate([w, w_src_cols, w_dst_cols], axis=1)  # [Fin, HF+2H]


def gat_forward(x, w, att_src, att_dst, bias, adj_i8, *,
                tile_n=128, tile_dst=128, tile_src=128):
    n, fin = x.shape
    num_heads, fout = att_src.shape
    hf = num_heads * fout
    assert n % tile_n == 0 and n % tile_dst == 0 and n % tile_src == 0

    w_aug = _augment_weights(w, att_src, att_dst)              # [Fin, HF+2H]

    # --- Stage 1: projection, once over node tiles ---------------------------
    proj = functools.partial(gat_proj_kernel, hf=hf)
    h, a = pl.pallas_call(
        proj,
        out_shape=(jax.ShapeDtypeStruct((n, hf), jnp.bfloat16),
                   jax.ShapeDtypeStruct((n, 2 * num_heads), jnp.float32)),
        grid_spec=pltpu.PrefetchScalarGridSpec(
            num_scalar_prefetch=0,
            grid=(n // tile_n,),
            in_specs=[
                pl.BlockSpec((tile_n, fin), lambda i: (i, 0)),               # x tile
                pl.BlockSpec((fin, hf + 2 * num_heads), lambda i: (0, 0)),   # W_aug (resident)
            ],
            out_specs=[
                pl.BlockSpec((tile_n, hf), lambda i: (i, 0)),                # h (bf16)
                pl.BlockSpec((tile_n, 2 * num_heads), lambda i: (i, 0)),     # [a_src | a_dst]
            ]),
        compiler_params=pltpu.CompilerParams(dimension_semantics=("parallel",)),
    )(x, w_aug)

    # Tiny one-time XLA ops (hoisted out of the per-tile grid): a_src to row
    # orientation so it rides along lanes in the attention kernel.
    a_src_rows = jnp.transpose(a[:, :num_heads])               # [H, N]
    a_dst = a[:, num_heads:]                                    # [N, H]

    # --- Stage 2: attention + aggregation ------------------------------------
    attn = functools.partial(gat_attn_kernel, num_heads=num_heads, fout=fout)
    return pl.pallas_call(
        attn,
        out_shape=jax.ShapeDtypeStruct((n, hf), jnp.float32),
        grid_spec=pltpu.PrefetchScalarGridSpec(
            num_scalar_prefetch=0,
            grid=(n // tile_dst, n // tile_src),                 # (dst, src) tiles
            in_specs=[
                pl.BlockSpec((tile_src, hf), lambda i, j: (j, 0)),            # h (source tile)
                pl.BlockSpec((num_heads, tile_src), lambda i, j: (0, j)),     # a_src rows
                pl.BlockSpec((tile_dst, num_heads), lambda i, j: (i, 0)),     # a_dst cols
                pl.BlockSpec((tile_dst, tile_src), lambda i, j: (i, j)),      # adj tile (int8)
                pl.BlockSpec((1, hf), lambda i, j: (0, 0)),                   # bias
            ],
            out_specs=pl.BlockSpec((tile_dst, hf), lambda i, j: (i, 0)),
            scratch_shapes=[
                pltpu.VMEM((num_heads, tile_dst, 1), jnp.float32),            # m (running max)
                pltpu.VMEM((num_heads, tile_dst, 1), jnp.float32),            # l (running sum)
                pltpu.VMEM((num_heads, tile_dst, fout), jnp.float32),         # acc
            ]),
        compiler_params=pltpu.CompilerParams(
            dimension_semantics=("parallel", "arbitrary"),       # dst tiles split across v7x TCs
            vmem_limit_bytes=32 * 1024 * 1024),                  # explicit, safe on v5e..v7x
    )(h, a_src_rows, a_dst, adj_i8, bias)


def gat_reference(x, w, att_src, att_dst, bias, adj):
    """Pure-JAX f32 reference (dense masked GAT) for correctness checking."""
    n = x.shape[0]
    num_heads, fout = att_src.shape
    h = x @ w                                             # [N, H*F]
    h = h.reshape(n, num_heads, fout)                     # [N, H, F]
    a_src = jnp.einsum("nhf,hf->nh", h, att_src)          # [N, H]
    a_dst = jnp.einsum("nhf,hf->nh", h, att_dst)          # [N, H]
    e = a_dst[:, None, :] + a_src[None, :, :]             # [N(dst), N(src), H]
    e = jnp.where(e > 0, e, NEG_SLOPE * e)
    e = jnp.where(adj[:, :, None] > 0, e, NEG_INF)
    e = e - jnp.max(e, axis=1, keepdims=True)
    p = jnp.exp(e)
    alpha = p / jnp.sum(p, axis=1, keepdims=True)
    out = jnp.einsum("ijh,jhf->ihf", alpha, h)            # [N, H, F]
    return out.reshape(n, num_heads * fout) + bias


if __name__ == "__main__":
    # Synthetic graph consistent with GATModel(in_features, out_features, num_heads).
    N = 256            # number of nodes (genes)
    FIN = 8            # in_features
    FOUT = 64          # out_features   (HEADS*FOUT = 128 -> lane-dense output)
    HEADS = 2          # num_heads
    E = 2048           # number of directed edges

    key = jax.random.PRNGKey(0)
    k_x, k_w, k_as, k_ad, k_b, k_e = jax.random.split(key, 6)

    x = jax.random.normal(k_x, (N, FIN), dtype=jnp.float32)
    w = jax.random.normal(k_w, (FIN, HEADS * FOUT), dtype=jnp.float32) / jnp.sqrt(FIN)
    att_src = jax.random.normal(k_as, (HEADS, FOUT), dtype=jnp.float32) / jnp.sqrt(FOUT)
    att_dst = jax.random.normal(k_ad, (HEADS, FOUT), dtype=jnp.float32) / jnp.sqrt(FOUT)
    bias = jax.random.normal(k_b, (1, HEADS * FOUT), dtype=jnp.float32) * 0.1

    # Random edge_index [2, E] -> dense int8 adjacency with adj[dst, src] = 1,
    # plus self loops (GATConv add_self_loops=True default; guarantees every
    # softmax row has at least one valid entry).
    edge_index = jax.random.randint(k_e, (2, E), 0, N, dtype=jnp.int32)
    src = np.asarray(edge_index[0])
    dst = np.asarray(edge_index[1])
    adj_np = np.zeros((N, N), dtype=np.int8)
    adj_np[dst, src] = 1
    adj_np[np.arange(N), np.arange(N)] = 1
    adj = jnp.asarray(adj_np)

    out = gat_forward(x, w, att_src, att_dst, bias, adj)
    out = jax.block_until_ready(out)

    ref = gat_reference(x, w, att_src, att_dst, bias, adj)
    # tolerance covers bf16 operands in the aggregation matmul and the approx
    # EUP reciprocal used for the softmax normalization (f32 variant passes 1e-5).
    np.testing.assert_allclose(np.asarray(out), np.asarray(ref), rtol=2e-2, atol=2e-2)

    # TODO(synk): CSV / torch_geometric Data construction (edge_index from
    # SL_Human_FinalCheck.txt, gene list) is host-side glue and is replaced by the
    # synthetic graph above.
    print("KERNEL_OK")
</pallas_src>

<mosaic_0001>
module attributes {stable_mosaic.version = 11 : i64} {
  func.func @gat_proj_kernel(%arg0: i32, %arg1: memref<128x8xf32, #tpu.memory_space<vmem>>, %arg2: memref<8x132xf32, #tpu.memory_space<vmem>>, %arg3: memref<128x128xbf16, #tpu.memory_space<vmem>>, %arg4: memref<128x4xf32, #tpu.memory_space<vmem>>) attributes {dimension_semantics = [#tpu.dimension_semantics<parallel>], iteration_bounds = array<i64: 2>, scalar_prefetch = 0 : i64, scratch_operands = 0 : i64, tpu.core_type = #tpu.core_type<tc>, window_params = [{transform_indices = @transform_0, window_bounds = array<i64: 128, 8>}, {pipeline_mode = #tpu.pipeline_mode<synchronous>, transform_indices = @transform_1, window_bounds = array<i64: 8, 132>}, {transform_indices = @transform_2, window_bounds = array<i64: 128, 128>}, {transform_indices = @transform_3, window_bounds = array<i64: 128, 4>}]} {
    %c0 = arith.constant 0 : index
    %c0_0 = arith.constant 0 : index
    %0 = vector.load %arg1[%c0, %c0_0] : memref<128x8xf32, #tpu.memory_space<vmem>>, vector<128x8xf32>
    %c0_1 = arith.constant 0 : index
    %c0_2 = arith.constant 0 : index
    %1 = vector.load %arg2[%c0_1, %c0_2] : memref<8x132xf32, #tpu.memory_space<vmem>>, vector<8x132xf32>
    %cst = arith.constant dense<0.000000e+00> : vector<128x132xf32>
    %2 = tpu.matmul %0, %1, %cst {dimension_numbers = #tpu.dot_dimension_numbers<[1], [0], [0], [1], [0, 0, 1, 1], [], []>} : vector<128x8xf32>, vector<8x132xf32>, vector<128x132xf32> -> vector<128x132xf32>
    %3 = vector.extract_strided_slice %2 {offsets = [0, 0], sizes = [128, 128], strides = [1, 1]} : vector<128x132xf32> to vector<128x128xf32>
    %4 = arith.truncf %3 : vector<128x128xf32> to vector<128x128xbf16>
    %c0_3 = arith.constant 0 : index
    %c0_4 = arith.constant 0 : index
    %5 = vector.load %arg3[%c0_3, %c0_4] : memref<128x128xbf16, #tpu.memory_space<vmem>>, vector<128x128xbf16>
    tpu.vector_store %arg3[%c0_3, %c0_4], %4 {strides = array<i32>} : memref<128x128xbf16, #tpu.memory_space<vmem>>, vector<128x128xbf16>,
    %6 = vector.extract_strided_slice %2 {offsets = [0, 128], sizes = [128, 4], strides = [1, 1]} : vector<128x132xf32> to vector<128x4xf32>
    %c0_5 = arith.constant 0 : index
    %c0_6 = arith.constant 0 : index
    %7 = vector.load %arg4[%c0_5, %c0_6] : memref<128x4xf32, #tpu.memory_space<vmem>>, vector<128x4xf32>
    tpu.vector_store %arg4[%c0_5, %c0_6], %6 {strides = array<i32>} : memref<128x4xf32, #tpu.memory_space<vmem>>, vector<128x4xf32>,
    return
  }
  func.func @transform_0(%arg0: i32) -> (i32, i32) {
    %c0_i32 = arith.constant 0 : i32
    %c0_i32_0 = arith.constant 0 : i32
    return %arg0, %c0_i32 : i32, i32
  }
  func.func @transform_1(%arg0: i32) -> (i32, i32) {
    %c0_i32 = arith.constant 0 : i32
    %c0_i32_0 = arith.constant 0 : i32
    %c0_i32_1 = arith.constant 0 : i32
    return %c0_i32, %c0_i32_0 : i32, i32
  }
  func.func @transform_2(%arg0: i32) -> (i32, i32) {
    %c0_i32 = arith.constant 0 : i32
    %c0_i32_0 = arith.constant 0 : i32
    return %arg0, %c0_i32 : i32, i32
  }
  func.func @transform_3(%arg0: i32) -> (i32, i32) {
    %c0_i32 = arith.constant 0 : i32
    %c0_i32_0 = arith.constant 0 : i32
    return %arg0, %c0_i32 : i32, i32
  }
}

</mosaic_0001>

<llo_original>
// kernel: tpu_custom_call.1
$region0: #{tpu_custom_call.1}
  #allocation0 [shape = 'u32[]', space=smem, size = 0x4, offset = 0x4, fixed_abs, tag = 'smem constant byte address 0x4 - core index']
  #allocation1 [shape = 'u32[144,128]{1,0:T(1,128)}', space=vmem, size = 0x12000, scoped, tag = 'internal scratch']
  %s0 = inlined_call_operand.vmem [shape: f32[256,8], index: 0, kind: input, shape index: {}]
  %s1 = inlined_call_operand.vmem [shape: f32[8,132], index: 1, kind: input, shape index: {}]
  %s2 = inlined_call_operand.hbm [shape: bf16[256,128], index: 2, kind: output, shape index: {0}]
  %s3 = inlined_call_operand.vmem [shape: f32[256,4], index: 3, kind: output, shape index: {1}]
  %4 = xla_tuple %s2, %s3
  %s5 = sld [smem:[#allocation0]]
  $region49: #{tpu_custom_call.1} parent=0
    _
  %s7 = ssub.s32 1, %s5
  %s8 = scalar_select 0, %s7, %s5
  $region1: #{tpu_custom_call.1} parent=0
    #allocation2 [shape = 'u8[65536]{0}', space=vmem, size = 0x10000, scoped, tag = 'output window, operand 0']
    #allocation3 [shape = 's32[2]{0}', space=sflag, size = 0x8, scoped, tag = 'scoped memory for tpu_custom_call.1']
    %9 = vsyncpa [#allocation3], 0
    %s10 = scalar_lea.sflag [#allocation3], 1
    %11 = vsyncpa %s10, 0
    loop: start=0, step=1, limit=4
    $region2: #{tpu_custom_call.1} parent=1 // loop_pre_header
      _
    $region3: #{tpu_custom_call.1} parent=1 // loop_header
      %s13 = sphi 0, %s17
      %p14 = scmp.ge.s32.totalorder %s13, 4
      %s23 = sphi 0, %s25
      %s26 = sphi 0, %s23
      %s27 = sphi 0, %s26
      %s43 = sphi 0, %s27
      %s47 = sphi 0, %s47
      %s49 = sphi 0, %s47
      %s50 = sphi 0, %s49
      %s64 = sphi 0, %s50
      %s70 = sphi 0, %s72
      %s73 = sphi 0, %s70
      %s74 = sphi 0, %s73
      %s90 = sphi 0, %s74
      %s96 = sphi 0, %s98
      %s99 = sphi 0, %s96
      %s100 = sphi 0, %s99
      %s116 = sphi 0, %s100
    $region4: #{tpu_custom_call.1} parent=1 // loop_header_branch
      %16 = sbr.rel (%p14) target = $region8
    $region5: #{tpu_custom_call.1} parent=1 // loop_body
      %s18 = ssub.s32 %s13, 1
      %s19 = ssub.s32 %s13, 2
      %s20 = sadd.s32 %s13, 1
      %s21 = ssub.s32 %s13, %s20
      %p22 = scmp.eq.s32.totalorder %s21, 0
      %s24 = sadd.s32 %s23, 1
      %s25 = scalar_select %p22, %s23, %s24
      %p28 = pneg %p22
      %p29 = scmp.eq.s32.totalorder %s13, 1
      %p30 = por %p28, %p29
      %p31 = scmp.ne.s32.totalorder %s23, %s26
      %p32 = scmp.eq.s32.totalorder %s13, 0
      %p33 = por %p31, %p32
      %p34 = scmp.ne.s32.totalorder %s23, %s26
      %p35 = scmp.eq.s32.totalorder %s18, 1
      %p36 = por %p34, %p35
      %p37 = scmp.ne.s32.totalorder %s26, %s27
      %p38 = scmp.eq.s32.totalorder %s18, 0
      %p39 = por %p37, %p38
      %p40 = scmp.ne.s32.totalorder %s26, %s27
      %p41 = scmp.eq.s32.totalorder %s19, 1
      %p42 = por %p40, %p41
      %p44 = scmp.ne.s32.totalorder %s27, %s43
      %p45 = scmp.eq.s32.totalorder %s19, 0
      %p46 = por %p44, %p45
      %s48 = sadd.s32 %s47, 1
      %p51 = scmp.eq.s32.totalorder %s13, 1
      %p52 = scmp.ne.s32.totalorder %s47, %s49
      %p53 = scmp.eq.s32.totalorder %s13, 0
      %p54 = por %p52, %p53
      %p55 = scmp.ne.s32.totalorder %s47, %s49
      %p56 = scmp.eq.s32.totalorder %s18, 1
      %p57 = por %p55, %p56
      %p58 = scmp.ne.s32.totalorder %s49, %s50
      %p59 = scmp.eq.s32.totalorder %s18, 0
      %p60 = por %p58, %p59
      %p61 = scmp.ne.s32.totalorder %s49, %s50
      %p62 = scmp.eq.s32.totalorder %s19, 1
      %p63 = por %p61, %p62
      %p65 = scmp.ne.s32.totalorder %s50, %s64
      %p66 = scmp.eq.s32.totalorder %s19, 0
      %p67 = por %p65, %p66
      %s68 = ssub.s32 %s13, %s20
      %p69 = scmp.eq.s32.totalorder %s68, 0
      %s71 = sadd.s32 %s70, 1
      %s72 = scalar_select %p69, %s70, %s71
      %p75 = pneg %p69
      %p76 = scmp.eq.s32.totalorder %s13, 1
      %p77 = por %p75, %p76
      %p78 = scmp.ne.s32.totalorder %s70, %s73
      %p79 = scmp.eq.s32.totalorder %s13, 0
      %p80 = por %p78, %p79
      %p81 = scmp.ne.s32.totalorder %s70, %s73
      %p82 = scmp.eq.s32.totalorder %s18, 1
      %p83 = por %p81, %p82
      %p84 = scmp.ne.s32.totalorder %s73, %s74
      %p85 = scmp.eq.s32.totalorder %s18, 0
      %p86 = por %p84, %p85
      %p87 = scmp.ne.s32.totalorder %s73, %s74
      %p88 = scmp.eq.s32.totalorder %s19, 1
      %p89 = por %p87, %p88
      %p91 = scmp.ne.s32.totalorder %s74, %s90
      %p92 = scmp.eq.s32.totalorder %s19, 0
      %p93 = por %p91, %p92
      %s94 = ssub.s32 %s13, %s20
      %p95 = scmp.eq.s32.totalorder %s94, 0
      %s97 = sadd.s32 %s96, 1
      %s98 = scalar_select %p95, %s96, %s97
      %p101 = pneg %p95
      %p102 = scmp.eq.s32.totalorder %s13, 1
      %p103 = por %p101, %p102
      %p104 = scmp.ne.s32.totalorder %s96, %s99
      %p105 = scmp.eq.s32.totalorder %s13, 0
      %p106 = por %p104, %p105
      %p107 = scmp.ne.s32.totalorder %s96, %s99
      %p108 = scmp.eq.s32.totalorder %s18, 1
      %p109 = por %p107, %p108
      %p110 = scmp.ne.s32.totalorder %s99, %s100
      %p111 = scmp.eq.s32.totalorder %s18, 0
      %p112 = por %p110, %p111
      %p113 = scmp.ne.s32.totalorder %s99, %s100
      %p114 = scmp.eq.s32.totalorder %s19, 1
      %p115 = por %p113, %p114
      %p117 = scmp.ne.s32.totalorder %s100, %s116
      %p118 = scmp.eq.s32.totalorder %s19, 0
      %p119 = por %p117, %p118
      %p120 = scmp.le.s32.totalorder 1, %s13
      %p121 = scmp.lt.s32.totalorder %s13, 3
      %p122 = pnand %p120, %p121
      %p123 = pneg %p122
      // Predicated region
      $region9: #{tpu_custom_call.1} parent=5 // pred_check
        _
      $region10: #{tpu_custom_call.1} parent=5 // pred_check_branch
        %125 = sbr.rel (%p122) target = $region12
      $region11: #{tpu_custom_call.1} parent=5 // pred_region
        %s126 = ssub.s32 %s13, 1
        // Predicated region
        $region13: #{tpu_custom_call.1} parent=11 // pred_check
          %p127 = pneg %p60
        $region14: #{tpu_custom_call.1} parent=11 // pred_check_branch
          %129 = sbr.rel (%p127) target = $region16
        $region15: #{tpu_custom_call.1} parent=11 // pred_region
          _
        $region16: #{tpu_custom_call.1} parent=11 // pred_fallthru
          _
      $region12: #{tpu_custom_call.1} parent=5 // pred_fallthru
        _
      %p130 = scmp.lt.s32.totalorder %s13, 2
      // Predicated region
      $region17: #{tpu_custom_call.1} parent=5 // pred_check
        %p131 = pneg %p130
      $region18: #{tpu_custom_call.1} parent=5 // pred_check_branch
        %133 = sbr.rel (%p131) target = $region20
      $region19: #{tpu_custom_call.1} parent=5 // pred_region
        // Predicated region
        $region21: #{tpu_custom_call.1} parent=19 // pred_check
          %p134 = pneg %p33
        $region22: #{tpu_custom_call.1} parent=19 // pred_check_branch
          %136 = sbr.rel (%p134) target = $region24
        $region23: #{tpu_custom_call.1} parent=19 // pred_region
          %s137 = smul.u32 16, %s13
          %p138 = scmp.lt.s32.totalorder %s137, 31
          %s139 = scalar_select %p138, %s137, 31
          %s140 = smul.addr %s139, 8
          %s141 = scalar_lea.vmem %s0, %s140
          %s142 = smul.u32 16, %s13
        $region24: #{tpu_custom_call.1} parent=19 // pred_fallthru
          _
      $region20: #{tpu_custom_call.1} parent=5 // pred_fallthru
        _
      %p143 = scmp.le.s32.totalorder 1, %s13
      %p144 = scmp.lt.s32.totalorder %s13, 3
      %p145 = pnand %p143, %p144
      %p146 = pneg %p145
      // Predicated region
      $region25: #{tpu_custom_call.1} parent=5 // pred_check
        _
      $region26: #{tpu_custom_call.1} parent=5 // pred_check_branch
        %148 = sbr.rel (%p145) target = $region28
      $region27: #{tpu_custom_call.1} parent=5 // pred_region
        %s149 = ssub.s32 %s13, 1
        %s150 = smul.u32 16, %s18
        %p151 = scmp.lt.s32.totalorder %s150, 31
        %s152 = scalar_select %p151, %s150, 31
        %s153 = smul.addr %s152, 8
        %s154 = scalar_lea.vmem %s0, %s153
        %p155 = pneg %p39
        %p156 = pneg %p36
        %p157 = pneg %p60
        %p158 = pneg %p57
        %p159 = pneg %p86
        %p160 = pneg %p83
        %s161 = sand.u32 %s73, 1
        %s162 = scalar_lea.sflag [#allocation3], %s161
        %s163 = sand.u32 %s73, 1
        %s164 = smul.addr %s163, 64
        %s165 = scalar_lea.vmem [#allocation2], %s164
        %p166 = pneg %p112
        %p167 = pneg %p109
        %s168 = smul.u32 16, %s18
        %p169 = scmp.lt.s32.totalorder %s168, 31
        %s170 = scalar_select %p169, %s168, 31
        %s171 = smul.addr %s170, 8
        %s172 = scalar_lea.vmem %s3, %s171
        %s173 = smul.u32 16, %s18
        %p174 = scmp.lt.s32.totalorder %s173, 31
        %s175 = scalar_select %p174, %s173, 31
        %s176 = smul.addr %s175, 8
        %s177 = scalar_lea.vmem %s0, %s176
        %s178 = smul.u32 16, %s18
        %s179 = smul.u32 16, %s18
        %s180 = smul.u32 16, %s18
        %p181 = scmp.lt.s32.totalorder %s180, 31
        %s182 = scalar_select %p181, %s180, 31
        %s183 = smul.addr %s182, 8
        %s184 = scalar_lea.vmem %s3, %s183
        %s185 = smul.u32 16, %s18
        %v186 = vld [vmem:[%s177] sm:$0xff]
        %v187 = vld [vmem:[%s177 + $0x8] sm:$0xff]
        %v188 = vld [vmem:[%s177 + $0x10] sm:$0xff]
        %v189 = vld [vmem:[%s177 + $0x18] sm:$0xff]
        %v190 = vld [vmem:[%s177 + $0x20] sm:$0xff]
        %v191 = vld [vmem:[%s177 + $0x28] sm:$0xff]
        %v192 = vld [vmem:[%s177 + $0x30] sm:$0xff]
        %v193 = vld [vmem:[%s177 + $0x38] sm:$0xff]
        %v194 = vld [vmem:[%s177 + $0x40] sm:$0xff]
        %v195 = vld [vmem:[%s177 + $0x48] sm:$0xff]
        %v196 = vld [vmem:[%s177 + $0x50] sm:$0xff]
        %v197 = vld [vmem:[%s177 + $0x58] sm:$0xff]
        %v198 = vld [vmem:[%s177 + $0x60] sm:$0xff]
        %v199 = vld [vmem:[%s177 + $0x68] sm:$0xff]
        %v200 = vld [vmem:[%s177 + $0x70] sm:$0xff]
        %v201 = vld [vmem:[%s177 + $0x78] sm:$0xff]
        %v202 = vld [vmem:[%s1] sm:$0xff]
        %v203 = vld [vmem:[%s1 + $0x8] sm:$0xff]
        %vm204 = vcmask 64512
        %v206 = vsel %vm204, %v186, 0
        %v209 = vsel %vm204, %v187, 0
        %v212 = vsel %vm204, %v188, 0
        %v215 = vsel %vm204, %v189, 0
        %v218 = vsel %vm204, %v190, 0
        %v221 = vsel %vm204, %v191, 0
        %v224 = vsel %vm204, %v192, 0
        %v227 = vsel %vm204, %v193, 0
        %v230 = vsel %vm204, %v194, 0
        %v233 = vsel %vm204, %v195, 0
        %v236 = vsel %vm204, %v196, 0
        %v239 = vsel %vm204, %v197, 0
        %v242 = vsel %vm204, %v198, 0
        %v245 = vsel %vm204, %v199, 0
        %v248 = vsel %vm204, %v200, 0
        %v251 = vsel %vm204, %v201, 0
        %253 = vmatprep.subr.mxu0 %v203
        %254 = vmatpush1.msra.mxu0 %v202
        %255 = vmatprep.subr.mxu0 0.0
        %256 = vmatpush1.msra.mxu0 0.0
        %257 = vmatprep.subr.mxu0 0.0
        %258 = vmatpush1.msra.mxu0 0.0
        %259 = vmatprep.subr.mxu0 0.0
        %260 = vmatpush1.msra.mxu0 0.0
        %261 = vmatprep.subr.mxu0 0.0
        %262 = vmatpush1.msra.mxu0 0.0
        %263 = vmatprep.subr.mxu0 0.0
        %264 = vmatpush1.msra.mxu0 0.0
        %265 = vmatprep.subr.mxu0 0.0
        %266 = vmatpush1.msra.mxu0 0.0
        %267 = vmatprep.subr.mxu0 0.0
        %268 = vmatpush1.msra.mxu0 0.0
        %269 = vmatprep.subr.mxu0 0.0
        %270 = vmatpush1.msra.mxu0 0.0
        %271 = vmatprep.subr.mxu0 0.0
        %272 = vmatpush1.msra.mxu0 0.0
        %273 = vmatprep.subr.mxu0 0.0
        %274 = vmatpush1.msra.mxu0 0.0
        %275 = vmatprep.subr.mxu0 0.0
        %276 = vmatpush1.msra.mxu0 0.0
        %277 = vmatprep.subr.mxu0 0.0
        %278 = vmatpush1.msra.mxu0 0.0
        %279 = vmatprep.subr.mxu0 0.0
        %280 = vmatpush1.msra.mxu0 0.0
        %281 = vmatprep.subr.mxu0 0.0
        %282 = vmatpush1.msra.mxu0 0.0
        %283 = vmatprep.subr.mxu0 0.0
        %284 = vmatpush1.msra.mxu0 0.0
        %285 = vmatprep.subr.mxu0 0.0
        %286 = vmatpush1.msra.mxu0 0.0
        %287 = vmatprep.subr.mxu0 0.0
        %288 = vmatpush1.msra.mxu0 0.0
        %289 = vmatprep.subr.mxu0 0.0
        %290 = vmatpush1.msra.mxu0 0.0
        %291 = vmatprep.subr.mxu0 0.0
        %292 = vmatpush1.msra.mxu0 0.0
        %293 = vmatprep.subr.mxu0 0.0
        %294 = vmatpush1.msra.mxu0 0.0
        %295 = vmatprep.subr.mxu0 0.0
        %296 = vmatpush1.msra.mxu0 0.0
        %297 = vmatprep.subr.mxu0 0.0
        %298 = vmatpush1.msra.mxu0 0.0
        %299 = vmatprep.subr.mxu0 0.0
        %300 = vmatpush1.msra.mxu0 0.0
        %301 = vmatprep.subr.mxu0 0.0
        %302 = vmatpush1.msra.mxu0 0.0
        %303 = vmatprep.subr.mxu0 0.0
        %304 = vmatpush1.msra.mxu0 0.0
        %305 = vmatprep.subr.mxu0 0.0
        %306 = vmatpush1.msra.mxu0 0.0
        %307 = vmatprep.subr.mxu0 0.0
        %308 = vmatpush1.msra.mxu0 0.0
        %309 = vmatprep.subr.mxu0 0.0
        %310 = vmatpush1.msra.mxu0 0.0
        %311 = vmatprep.subr.mxu0 0.0
        %312 = vmatpush1.msra.mxu0 0.0
        %313 = vmatprep.subr.mxu0 0.0
        %314 = vmatpush1.msra.mxu0 0.0
        %315 = vmatprep.subr.mxu0 0.0
        %316 = vmatpush1.msra.mxu0 0.0
        %317 = vmatprep.mubr.f32.mxu0 0.0
        %318 = vmatmul.mubr.f32.gmra.mrb[0].mxu0 %v206
        %v319 = vpop.f32.mrb[0].mxu0
        %v320 = vadd.f32 0.0, %v319
        %v321 = vpop.f32.mrb[0].mxu0
        %v322 = vadd.f32 0.0, %v321
        %323 = vmatprep.mubr.f32.mxu0 0.0
        %324 = vmatmul.mubr.f32.gmra.mrb[0].mxu0 %v209
        %v325 = vpop.f32.mrb[0].mxu0
        %v326 = vadd.f32 0.0, %v325
        %v327 = vpop.f32.mrb[0].mxu0
        %v328 = vadd.f32 0.0, %v327
        %329 = vmatprep.mubr.f32.mxu0 0.0
        %330 = vmatmul.mubr.f32.gmra.mrb[0].mxu0 %v212
        %v331 = vpop.f32.mrb[0].mxu0
        %v332 = vadd.f32 0.0, %v331
        %v333 = vpop.f32.mrb[0].mxu0
        %v334 = vadd.f32 0.0, %v333
        %335 = vmatprep.mubr.f32.mxu0 0.0
        %336 = vmatmul.mubr.f32.gmra.mrb[0].mxu0 %v215
        %v337 = vpop.f32.mrb[0].mxu0
        %v338 = vadd.f32 0.0, %v337
        %v339 = vpop.f32.mrb[0].mxu0
        %v340 = vadd.f32 0.0, %v339
        %341 = vmatprep.mubr.f32.mxu0 0.0
        %342 = vmatmul.mubr.f32.gmra.mrb[0].mxu0 %v218
        %v343 = vpop.f32.mrb[0].mxu0
        %v344 = vadd.f32 0.0, %v343
        %v345 = vpop.f32.mrb[0].mxu0
        %v346 = vadd.f32 0.0, %v345
        %347 = vmatprep.mubr.f32.mxu0 0.0
        %348 = vmatmul.mubr.f32.gmra.mrb[0].mxu0 %v221
        %v349 = vpop.f32.mrb[0].mxu0
        %v350 = vadd.f32 0.0, %v349
        %v351 = vpop.f32.mrb[0].mxu0
        %v352 = vadd.f32 0.0, %v351
        %353 = vmatprep.mubr.f32.mxu0 0.0
        %354 = vmatmul.mubr.f32.gmra.mrb[0].mxu0 %v224
        %v355 = vpop.f32.mrb[0].mxu0
        %v356 = vadd.f32 0.0, %v355
        %v357 = vpop.f32.mrb[0].mxu0
        %v358 = vadd.f32 0.0, %v357
        %359 = vmatprep.mubr.f32.mxu0 0.0
        %360 = vmatmul.mubr.f32.gmra.mrb[0].mxu0 %v227
        %v361 = vpop.f32.mrb[0].mxu0
        %v362 = vadd.f32 0.0, %v361
        %v363 = vpop.f32.mrb[0].mxu0
        %v364 = vadd.f32 0.0, %v363
        %365 = vmatprep.mubr.f32.mxu0 0.0
        %366 = vmatmul.mubr.f32.gmra.mrb[0].mxu0 %v230
        %v367 = vpop.f32.mrb[0].mxu0
        %v368 = vadd.f32 0.0, %v367
        %v369 = vpop.f32.mrb[0].mxu0
        %v370 = vadd.f32 0.0, %v369
        %371 = vmatprep.mubr.f32.mxu0 0.0
        %372 = vmatmul.mubr.f32.gmra.mrb[0].mxu0 %v233
        %v373 = vpop.f32.mrb[0].mxu0
        %v374 = vadd.f32 0.0, %v373
        %v375 = vpop.f32.mrb[0].mxu0
        %v376 = vadd.f32 0.0, %v375
        %377 = vmatprep.mubr.f32.mxu0 0.0
        %378 = vmatmul.mubr.f32.gmra.mrb[0].mxu0 %v236
        %v379 = vpop.f32.mrb[0].mxu0
        %v380 = vadd.f32 0.0, %v379
        %v381 = vpop.f32.mrb[0].mxu0
        %v382 = vadd.f32 0.0, %v381
        %383 = vmatprep.mubr.f32.mxu0 0.0
        %384 = vmatmul.mubr.f32.gmra.mrb[0].mxu0 %v239
        %v385 = vpop.f32.mrb[0].mxu0
        %v386 = vadd.f32 0.0, %v385
        %v387 = vpop.f32.mrb[0].mxu0
        %v388 = vadd.f32 0.0, %v387
        %389 = vmatprep.mubr.f32.mxu0 0.0
        %390 = vmatmul.mubr.f32.gmra.mrb[0].mxu0 %v242
        %v391 = vpop.f32.mrb[0].mxu0
        %v392 = vadd.f32 0.0, %v391
        %v393 = vpop.f32.mrb[0].mxu0
        %v394 = vadd.f32 0.0, %v393
        %395 = vmatprep.mubr.f32.mxu0 0.0
        %396 = vmatmul.mubr.f32.gmra.mrb[0].mxu0 %v245
        %v397 = vpop.f32.mrb[0].mxu0
        %v398 = vadd.f32 0.0, %v397
        %v399 = vpop.f32.mrb[0].mxu0
        %v400 = vadd.f32 0.0, %v399
        %401 = vmatprep.mubr.f32.mxu0 0.0
        %402 = vmatmul.mubr.f32.gmra.mrb[0].mxu0 %v248
        %v403 = vpop.f32.mrb[0].mxu0
        %v404 = vadd.f32 0.0, %v403
        %v405 = vpop.f32.mrb[0].mxu0
        %v406 = vadd.f32 0.0, %v405
        %407 = vmatprep.mubr.f32.mxu0 0.0
        %408 = vmatmul.mubr.f32.gmra.mrb[0].mxu0 %v251
        %v409 = vpop.f32.mrb[0].mxu0
        %v410 = vadd.f32 0.0, %v409
        %v411 = vpop.f32.mrb[0].mxu0
        %v412 = vadd.f32 0.0, %v411
        %413 = vdwg.mxu0
        %v414 = vpack.c.bf16 %v326, %v320
        %v415 = vpack.c.bf16 %v338, %v332
        %v416 = vpack.c.bf16 %v350, %v344
        %v417 = vpack.c.bf16 %v362, %v356
        %v418 = vpack.c.bf16 %v374, %v368
        %v419 = vpack.c.bf16 %v386, %v380
        %v420 = vpack.c.bf16 %v398, %v392
        %v421 = vpack.c.bf16 %v410, %v404
        %v430 = vunpack.c.l.b16 %v414
        %v431 = vunpack.c.h.b16 %v414
        %v432 = vunpack.c.l.b16 %v415
        %v433 = vunpack.c.h.b16 %v415
        %v434 = vunpack.c.l.b16 %v416
        %v435 = vunpack.c.h.b16 %v416
        %v436 = vunpack.c.l.b16 %v417
        %v437 = vunpack.c.h.b16 %v417
        %v438 = vunpack.c.l.b16 %v418
        %v439 = vunpack.c.h.b16 %v418
        %v440 = vunpack.c.l.b16 %v419
        %v441 = vunpack.c.h.b16 %v419
        %v442 = vunpack.c.l.b16 %v420
        %v443 = vunpack.c.h.b16 %v420
        %v444 = vunpack.c.l.b16 %v421
        %v445 = vunpack.c.h.b16 %v421
        %v446 = vpack.c.b16 %v430, %v430
        %v447 = vpack.c.b16 %v431, %v431
        %v448 = vpack.c.b16 %v432, %v432
        %v449 = vpack.c.b16 %v433, %v433
        %v450 = vpack.c.b16 %v434, %v434
        %v451 = vpack.c.b16 %v435, %v435
        %v452 = vpack.c.b16 %v436, %v436
        %v453 = vpack.c.b16 %v437, %v437
        %v454 = vpack.c.b16 %v438, %v438
        %v455 = vpack.c.b16 %v439, %v439
        %v456 = vpack.c.b16 %v440, %v440
        %v457 = vpack.c.b16 %v441, %v441
        %v458 = vpack.c.b16 %v442, %v442
        %v459 = vpack.c.b16 %v443, %v443
        %v460 = vpack.c.b16 %v444, %v444
        %v461 = vpack.c.b16 %v445, %v445
        %478 = vst [vmem:[%s165] sm:$0xf] %v446
        %479 = vst [vmem:[%s165 + $0x4] sm:$0xf] %v447
        %480 = vst [vmem:[%s165 + $0x8] sm:$0xf] %v448
        %481 = vst [vmem:[%s165 + $0xc] sm:$0xf] %v449
        %482 = vst [vmem:[%s165 + $0x10] sm:$0xf] %v450
        %483 = vst [vmem:[%s165 + $0x14] sm:$0xf] %v451
        %484 = vst [vmem:[%s165 + $0x18] sm:$0xf] %v452
        %485 = vst [vmem:[%s165 + $0x1c] sm:$0xf] %v453
        %486 = vst [vmem:[%s165 + $0x20] sm:$0xf] %v454
        %487 = vst [vmem:[%s165 + $0x24] sm:$0xf] %v455
        %488 = vst [vmem:[%s165 + $0x28] sm:$0xf] %v456
        %489 = vst [vmem:[%s165 + $0x2c] sm:$0xf] %v457
        %490 = vst [vmem:[%s165 + $0x30] sm:$0xf] %v458
        %491 = vst [vmem:[%s165 + $0x34] sm:$0xf] %v459
        %492 = vst [vmem:[%s165 + $0x38] sm:$0xf] %v460
        %493 = vst [vmem:[%s165 + $0x3c] sm:$0xf] %v461
        %vm494 = vcmask 31744
        %495 = vst.msk [vmem:[%s184] sm:$0xff] %vm494, %v322
        %496 = vst.msk [vmem:[%s184 + $0x8] sm:$0xff] %vm494, %v328
        %497 = vst.msk [vmem:[%s184 + $0x10] sm:$0xff] %vm494, %v334
        %498 = vst.msk [vmem:[%s184 + $0x18] sm:$0xff] %vm494, %v340
        %499 = vst.msk [vmem:[%s184 + $0x20] sm:$0xff] %vm494, %v346
        %500 = vst.msk [vmem:[%s184 + $0x28] sm:$0xff] %vm494, %v352
        %501 = vst.msk [vmem:[%s184 + $0x30] sm:$0xff] %vm494, %v358
        %502 = vst.msk [vmem:[%s184 + $0x38] sm:$0xff] %vm494, %v364
        %503 = vst.msk [vmem:[%s184 + $0x40] sm:$0xff] %vm494, %v370
        %504 = vst.msk [vmem:[%s184 + $0x48] sm:$0xff] %vm494, %v376
        %505 = vst.msk [vmem:[%s184 + $0x50] sm:$0xff] %vm494, %v382
        %506 = vst.msk [vmem:[%s184 + $0x58] sm:$0xff] %vm494, %v388
        %507 = vst.msk [vmem:[%s184 + $0x60] sm:$0xff] %vm494, %v394
        %508 = vst.msk [vmem:[%s184 + $0x68] sm:$0xff] %vm494, %v400
        %509 = vst.msk [vmem:[%s184 + $0x70] sm:$0xff] %vm494, %v406
        %510 = vst.msk [vmem:[%s184 + $0x78] sm:$0xff] %vm494, %v412
        %s511 = sand.u32 %s73, 1
        %s512 = scalar_lea.sflag [#allocation3], %s511
        %s513 = sand.u32 %s73, 1
        %s514 = smul.addr %s513, 64
        %s515 = scalar_lea.vmem [#allocation2], %s514
        %s516 = smul.u32 16, %s18
        %p517 = scmp.lt.s32.totalorder %s516, 31
        %s518 = scalar_select %p517, %s516, 31
        %s519 = smul.addr %s518, 8
        %s520 = scalar_lea.vmem %s3, %s519
        // Predicated region
        $region29: #{tpu_custom_call.1} parent=27 // pred_check
          %p521 = pneg %p83
        $region30: #{tpu_custom_call.1} parent=27 // pred_check_branch
          %523 = sbr.rel (%p521) target = $region32
        $region31: #{tpu_custom_call.1} parent=27 // pred_region
          %s524 = smul.u32 16, %s18
          %s526 = ssub.s32 1024, 1024
          %527 = vsyncadd %s512, %s526
          %s528 = smul.addr %s524, 64
          %s529 = scalar_lea.hbm %s2, %s528
          %s530 = sshll.u32 %s515, 4
          %s531 = int_to_ptr.vmem [resolvable:$true] %s530
          %536 = dma.vmem_to_hbm [thread:$0]  %s531, 1024, %s529, %s512, 64, 64, 4
        $region32: #{tpu_custom_call.1} parent=27 // pred_fallthru
          _
        // Predicated region
        $region33: #{tpu_custom_call.1} parent=27 // pred_check
          %p537 = pneg %p109
        $region34: #{tpu_custom_call.1} parent=27 // pred_check_branch
          %539 = sbr.rel (%p537) target = $region36
        $region35: #{tpu_custom_call.1} parent=27 // pred_region
          %s540 = smul.u32 16, %s18
        $region36: #{tpu_custom_call.1} parent=27 // pred_fallthru
          _
      $region28: #{tpu_custom_call.1} parent=5 // pred_fallthru
        _
      %p541 = scmp.le.s32.totalorder 2, %s13
      // Predicated region
      $region37: #{tpu_custom_call.1} parent=5 // pred_check
        %p542 = pneg %p541
      $region38: #{tpu_custom_call.1} parent=5 // pred_check_branch
        %544 = sbr.rel (%p542) target = $region40
      $region39: #{tpu_custom_call.1} parent=5 // pred_region
        %s545 = ssub.s32 %s13, 2
        // Predicated region
        $region41: #{tpu_custom_call.1} parent=39 // pred_check
          %p546 = pneg %p89
        $region42: #{tpu_custom_call.1} parent=39 // pred_check_branch
          %548 = sbr.rel (%p546) target = $region44
        $region43: #{tpu_custom_call.1} parent=39 // pred_region
          %s549 = sand.u32 %s74, 1
          %s550 = scalar_lea.sflag [#allocation3], %s549
          %s551 = sand.u32 %s74, 1
          %s552 = smul.addr %s551, 64
          %s553 = scalar_lea.vmem [#allocation2], %s552
          %554 = dma.done %s550, 1024
        $region44: #{tpu_custom_call.1} parent=39 // pred_fallthru
          _
        // Predicated region
        $region45: #{tpu_custom_call.1} parent=39 // pred_check
          %p555 = pneg %p115
        $region46: #{tpu_custom_call.1} parent=39 // pred_check_branch
          %557 = sbr.rel (%p555) target = $region48
        $region47: #{tpu_custom_call.1} parent=39 // pred_region
          %s558 = smul.u32 16, %s19
          %p559 = scmp.lt.s32.totalorder %s558, 31
          %s560 = scalar_select %p559, %s558, 31
          %s561 = smul.addr %s560, 8
          %s562 = scalar_lea.vmem %s3, %s561
        $region48: #{tpu_custom_call.1} parent=39 // pred_fallthru
          _
      $region40: #{tpu_custom_call.1} parent=5 // pred_fallthru
        _
    $region6: #{tpu_custom_call.1} parent=1 // loop_footer
      %s17 = sadd.s32 1, %s13
    $region7: #{tpu_custom_call.1} parent=1 // loop_footer_branch
      %12 = sbr.rel target = $region3
    $region8: #{tpu_custom_call.1} parent=1 // loop_exit
      _
    %563 = vsyncpa [#allocation3], 1
    %s564 = scalar_lea.sflag [#allocation3], 1
    %565 = vsyncpa %s564, 1

</llo_original>
